<compile_context>
chip_gen: v7x
topology: tpu7x:2x2x1
jax: 0.10.0
libtpu: 0.0.40
codegen_flags: <defaults>
</compile_context>

<pallas_src>
import jax
import jax.numpy as jnp
from jax.experimental import pallas as pl
from jax.experimental.pallas import tpu as pltpu


DEFAULT_TOKEN_TILE = 256   # tokens (rows gathered) per grid step


def build_combined_weight(orig_weight, label_embedding, prompt_embedding):
    """Mirror of prompt_Embedding.weight(): torch prepends a zero row to
    [label; prompt] for its internal nn.Embedding and drops it again, so the
    effective table is just this concatenation."""
    return jnp.concatenate([orig_weight, label_embedding, prompt_embedding], axis=0)


def _gather_kernel(ids_ref, w_hbm, out_ref, sem):
    # ids_ref: (n_pad,) int32 token ids, scalar-prefetched into SMEM
    # w_hbm:   (V, D)   embedding table, left in HBM (pl.ANY) -- never in VMEM
    # out_ref: (T, D)   VMEM output tile for this grid step
    # sem:     single DMA semaphore shared by all row copies of this step
    t_tile = out_ref.shape[0]
    base = pl.program_id(0) * t_tile

    # Issue one row-copy per token; all T copies are in flight concurrently.
    @pl.loop(0, t_tile)
    def _start(t):
        row = ids_ref[base + t]
        pltpu.make_async_copy(
            w_hbm.at[pl.ds(row, 1), :],
            out_ref.at[pl.ds(t, 1), :],
            sem,
        ).start()

    # Every copy has the identical (1, D) shape, so draining the shared
    # semaphore with T identically-shaped waits retires all of them.
    @pl.loop(0, t_tile)
    def _wait(t):
        pltpu.make_async_copy(
            w_hbm.at[pl.ds(0, 1), :],
            out_ref.at[pl.ds(0, 1), :],
            sem,
        ).wait()


def prompt_embedding_forward(x, weight, *, token_tile=DEFAULT_TOKEN_TILE):
    """y = weight[x] via a scalar-prefetch DMA row gather (HBM-bandwidth bound).

    x:      (B, S) integer token ids (must be in [0, V) -- torch would raise on
            OOB ids; here OOB would be a DMA bounds error).
    weight: (V, D) combined embedding table (see build_combined_weight)
    returns (B, S, D)
    """
    B, S = x.shape
    V, D = weight.shape
    n = B * S

    # Sublane-aligned token tile; don't over-pad tiny inputs.
    tile = max(8, min(token_tile, pl.cdiv(n, 8) * 8))
    n_pad = pl.cdiv(n, tile) * tile

    # Padded tail ids point at row 0 (valid, harmless -- the tail is sliced off).
    ids = jnp.zeros((n_pad,), jnp.int32).at[:n].set(x.reshape(-1).astype(jnp.int32))

    itemsize = jnp.dtype(weight.dtype).itemsize
    cost = pl.CostEstimate(
        flops=0,
        transcendentals=0,
        bytes_accessed=n_pad * D * itemsize * 2 + n_pad * 4,
    )

    out = pl.pallas_call(
        _gather_kernel,
        out_shape=jax.ShapeDtypeStruct((n_pad, D), weight.dtype),
        grid_spec=pltpu.PrefetchScalarGridSpec(
            num_scalar_prefetch=1,                      # ids -> SMEM before grid
            grid=(n_pad // tile,),
            in_specs=[pl.BlockSpec(memory_space=pl.ANY)],   # table stays in HBM
            out_specs=pl.BlockSpec((tile, D), lambda i, ids_ref: (i, 0)),
            scratch_shapes=[pltpu.SemaphoreType.DMA(())],
        ),
        compiler_params=pltpu.CompilerParams(
            dimension_semantics=("arbitrary",),
        ),
        cost_estimate=cost,
    )(ids, weight)

    return out[:n].reshape(B, S, D)


if __name__ == "__main__":
    key = jax.random.PRNGKey(0)
    k1, k2, k3, k4 = jax.random.split(key, 4)

    # Small deterministic shapes consistent with the module.
    V_ORIG, N_LABELS, N_PROMPTS, D = 32, 4, 4, 128
    B, S = 2, 8
    PAD_TOKEN_ID = 0  # padding_idx only affects grads in torch; forward is a gather

    orig_weight = jax.random.normal(k1, (V_ORIG, D), jnp.float32)
    label_embedding = jax.random.normal(k2, (N_LABELS, D), jnp.float32)
    prompt_embedding = jax.random.normal(k3, (N_PROMPTS, D), jnp.float32)

    weight = build_combined_weight(orig_weight, label_embedding, prompt_embedding)
    V_total = weight.shape[0]            # == self.size in the torch module

    x = jax.random.randint(k4, (B, S), 0, V_total, dtype=jnp.int32)

    y = prompt_embedding_forward(x, weight)
    y = jax.block_until_ready(y)

    # Pure-JAX reference check (gather must be exact).
    y_ref = jnp.take(weight, x.reshape(-1), axis=0).reshape(B, S, D)
    assert y.shape == (B, S, D)
    assert jnp.array_equal(y, y_ref), "mismatch vs reference gather"

    # TODO(synk): padding_idx / gradient-zeroing semantics are backward-only in
    # torch and have no forward-pass equivalent here.
    print("KERNEL_OK")
</pallas_src>

<mosaic_0001>
module attributes {stable_mosaic.version = 11 : i64} {
  func.func @_gather_kernel(%arg0: i32, %arg1: memref<16xi32, #tpu.memory_space<smem>>, %arg2: memref<40x128xf32, #tpu.memory_space<any>>, %arg3: memref<16x128xf32, #tpu.memory_space<vmem>>, %arg4: memref<!tpu.dma_semaphore, #tpu.memory_space<semaphore_mem>>) attributes {dimension_semantics = [#tpu.dimension_semantics<arbitrary>], iteration_bounds = array<i64: 1>, scalar_prefetch = 1 : i64, scratch_operands = 1 : i64, tpu.core_type = #tpu.core_type<tc>, window_params = [{}, {transform_indices = @transform_1, window_bounds = array<i64: 16, 128>}]} {
    %c16_i32 = arith.constant 16 : i32
    %0 = arith.muli %arg0, %c16_i32 : i32
    %c0_i32 = arith.constant 0 : i32
    %c16_i32_0 = arith.constant 16 : i32
    %1 = arith.addi %c0_i32, %c16_i32_0 : i32
    %c1_i32 = arith.constant 1 : i32
    scf.for %arg5 = %c0_i32 to %1 step %c1_i32  : i32 {
      %c1_i32_5 = arith.constant 1 : i32
      %3 = arith.muli %arg5, %c1_i32_5 : i32
      %c0_i32_6 = arith.constant 0 : i32
      %4 = arith.addi %c0_i32_6, %3 : i32
      %5 = arith.addi %0, %4 : i32
      %6 = arith.index_cast %5 : i32 to index
      %7 = memref.load %arg1[%6] : memref<16xi32, #tpu.memory_space<smem>>
      %c0_i32_7 = arith.constant 0 : i32
      %8 = tpu.memref_slice %arg2[%7, %c0_i32_7] : memref<40x128xf32, #tpu.memory_space<any>> -> memref<1x128xf32, #tpu.memory_space<any>>
      %c0_i32_8 = arith.constant 0 : i32
      %9 = tpu.memref_slice %arg3[%4, %c0_i32_8] : memref<16x128xf32, #tpu.memory_space<vmem>> -> memref<1x128xf32, #tpu.memory_space<vmem>>
      tpu.enqueue_dma source(%8 : memref<1x128xf32, #tpu.memory_space<any>>) target(%9 : memref<1x128xf32, #tpu.memory_space<vmem>>) target_semaphore(%arg4 : memref<!tpu.dma_semaphore, #tpu.memory_space<semaphore_mem>>)
    }
    %c16_i32_1 = arith.constant 16 : i32
    %c0_i32_2 = arith.constant 0 : i32
    %c16_i32_3 = arith.constant 16 : i32
    %2 = arith.addi %c0_i32_2, %c16_i32_3 : i32
    %c1_i32_4 = arith.constant 1 : i32
    scf.for %arg5 = %c0_i32_2 to %2 step %c1_i32_4  : i32 {
      %c0_i32_5 = arith.constant 0 : i32
      %c0_i32_6 = arith.constant 0 : i32
      %3 = tpu.memref_slice %arg2[%c0_i32_5, %c0_i32_6] : memref<40x128xf32, #tpu.memory_space<any>> -> memref<1x128xf32, #tpu.memory_space<any>>
      %c0_i32_7 = arith.constant 0 : i32
      %c0_i32_8 = arith.constant 0 : i32
      %4 = tpu.memref_slice %arg3[%c0_i32_7, %c0_i32_8] : memref<16x128xf32, #tpu.memory_space<vmem>> -> memref<1x128xf32, #tpu.memory_space<vmem>>
      tpu.wait_dma2 semaphore(%arg4 : memref<!tpu.dma_semaphore, #tpu.memory_space<semaphore_mem>>) src(%3 : memref<1x128xf32, #tpu.memory_space<any>>) dst(%4 : memref<1x128xf32, #tpu.memory_space<vmem>>)
    }
    return
  }
  func.func @transform_1(%arg0: i32, %arg1: memref<16xi32, #tpu.memory_space<smem>>) -> (i32, i32) {
    %c0_i32 = arith.constant 0 : i32
    %c0_i32_0 = arith.constant 0 : i32
    return %arg0, %c0_i32 : i32, i32
  }
}

</mosaic_0001>

<llo_original>
// kernel: tpu_custom_call.1
$region0: #{tpu_custom_call.1}
  #allocation0 [shape = 'u32[]', space=smem, size = 0x4, offset = 0x4, fixed_abs, tag = 'smem constant byte address 0x4 - core index']
  #allocation1 [shape = 'u32[144,128]{1,0:T(1,128)}', space=vmem, size = 0x12000, scoped, tag = 'internal scratch']
  #allocation2 [shape = 's32[1]{0}', space=sflag, size = 0x4, scoped, tag = 'scratch operand']
  #allocation3 [shape = 's32[1]{0}', space=sflag, size = 0x4, scoped, tag = 'scoped memory for tpu_custom_call.1']
  #allocation4 [shape = 'u8[512]{0}', space=smem, size = 0x200, scoped, tag = 'prefetched SMEM operand 0']
  #allocation7 [shape = 's32[]', space=sflag, size = 0x4, offset = 0, fixed_abs, tag = 'sflag constant byte address 0x0 - dummy sync flag']
  #allocation8 [shape = 's32[]', space=sflag, size = 0x4, offset = 0, fixed_abs, tag = 'sflag constant byte address 0x0 - dummy sync flag']
  #allocation9 [shape = 'u32[]', space=smem, size = 0x4, offset = 0x44, fixed_abs, tag = 'smem constant byte address 0x44 - assertion arg 0']
  #allocation10 [shape = 'u32[]', space=smem, size = 0x4, offset = 0x48, fixed_abs, tag = 'smem constant byte address 0x48 - assertion arg 1']
  %s0 = inlined_call_operand.hbm [shape: s32[16], index: 0, kind: input, shape index: {}]
  %s1 = inlined_call_operand.hbm [shape: f32[40,128], index: 1, kind: input, shape index: {}]
  %s2 = inlined_call_operand.hbm [shape: f32[16,128], index: 2, kind: output, shape index: {}]
  %s3 = sld [smem:[#allocation0]]
  $region28: #{tpu_custom_call.1} parent=0
    _
  %s5 = ssub.s32 1, %s3
  %s6 = scalar_select 0, %s5, %s3
  %8 = dma.hbm_to_smem %s0, 16, [#allocation4], [#allocation3]
  %9 = dma.done [#allocation3], 16
  %10 = sfence
  $region1: #{tpu_custom_call.1} parent=0
    #allocation5 [shape = 'u8[8192]{0}', space=vmem, size = 0x2000, scoped, tag = 'output window, operand 0, single buffered']
    #allocation6 [shape = 's32[1]{0}', space=sflag, size = 0x4, scoped, tag = 'scoped memory for tpu_custom_call.1']
    %11 = vsyncpa [#allocation6], 0
    %s12 = smul.u32 0, 16
    loop: start=0, step=1, limit=16
    $region2: #{tpu_custom_call.1} parent=1 // loop_pre_header
      _
    $region3: #{tpu_custom_call.1} parent=1 // loop_header
      %s14 = sphi 0, %s18
      %p15 = scmp.ge.s32.totalorder %s14, 16
    $region4: #{tpu_custom_call.1} parent=1 // loop_header_branch
      %17 = sbr.rel (%p15) target = $region8
    $region5: #{tpu_custom_call.1} parent=1 // loop_body
      %s19 = sadd.s32 %s12, %s14
      %s20 = sld [smem:[#allocation4 + %s19]]
      %s21 = smul.addr %s20, 16
      %s22 = scalar_lea.hbm %s1, %s21
      %s23 = scalar_lea.vmem [#allocation5], %s14
      // Predicated region
      $region9: #{tpu_custom_call.1} parent=5 // pred_check
        _
      $region10: #{tpu_custom_call.1} parent=5 // pred_check_branch
        %25 = sbr.rel target = $region12
      $region11: #{tpu_custom_call.1} parent=5 // pred_region
        %26 = sst [smem:[#allocation9]] [#allocation8]
        %27 = sst [smem:[#allocation10]] [#allocation7]
      $region12: #{tpu_custom_call.1} parent=5 // pred_fallthru
        _
      %29 = shalt.err (0)
      %s31 = sshll.u32 %s23, 4
      %s32 = int_to_ptr.vmem [resolvable:$true] %s31
      %34 = dma.hbm_to_vmem [thread:$0]  %s22, 16, %s32, [#allocation2]
    $region6: #{tpu_custom_call.1} parent=1 // loop_footer
      %s18 = sadd.s32 1, %s14
    $region7: #{tpu_custom_call.1} parent=1 // loop_footer_branch
      %13 = sbr.rel target = $region3
    $region8: #{tpu_custom_call.1} parent=1 // loop_exit
      _
    loop: start=0, step=1, limit=16
    $region13: #{tpu_custom_call.1} parent=1 // loop_pre_header
      _
    $region14: #{tpu_custom_call.1} parent=1 // loop_header
      %s36 = sphi 0, %s40
      %p37 = scmp.ge.s32.totalorder %s36, 16
    $region15: #{tpu_custom_call.1} parent=1 // loop_header_branch
      %39 = sbr.rel (%p37) target = $region19
    $region16: #{tpu_custom_call.1} parent=1 // loop_body
      %s41 = smul.u32 1, 1
      %s42 = sshll.u32 %s41, 4
      %43 = dma.done [#allocation2], %s42
    $region17: #{tpu_custom_call.1} parent=1 // loop_footer
      %s40 = sadd.s32 1, %s36
    $region18: #{tpu_custom_call.1} parent=1 // loop_footer_branch
      %35 = sbr.rel target = $region14
    $region19: #{tpu_custom_call.1} parent=1 // loop_exit
      _
    // Predicated region
    $region20: #{tpu_custom_call.1} parent=1 // pred_check
      _
    $region21: #{tpu_custom_call.1} parent=1 // pred_check_branch
      %45 = sbr.rel (0) target = $region23
    $region22: #{tpu_custom_call.1} parent=1 // pred_region
      %s47 = ssub.s32 256, 256
      %48 = vsyncadd [#allocation6], %s47
      %s49 = sshll.u32 [#allocation5], 4
      %s50 = int_to_ptr.vmem [resolvable:$true] %s49
      %55 = dma.vmem_to_hbm [thread:$0]  %s50, 256, %s2, [#allocation6], 128, 128, 8
    $region23: #{tpu_custom_call.1} parent=1 // pred_fallthru
      _
    // Predicated region
    $region24: #{tpu_custom_call.1} parent=1 // pred_check
      _
    $region25: #{tpu_custom_call.1} parent=1 // pred_check_branch
      %57 = sbr.rel (0) target = $region27
    $region26: #{tpu_custom_call.1} parent=1 // pred_region
      %58 = dma.done [#allocation6], 256
    $region27: #{tpu_custom_call.1} parent=1 // pred_fallthru
      _
    %59 = vsyncpa [#allocation6], 1
  %60 = vsyncmov [#allocation2]
  %s61 = vpop.sfrf %60
  %p62 = scmp.eq.s32.totalorder %s61, 0
  %p63 = pneg %p62
  %65 = shalt.err (%p63)

</llo_original>
